<compile_context>
chip_gen: v5e
topology: v5e:2x2
jax: 0.10.0
libtpu: 0.0.40
codegen_flags: <defaults>
</compile_context>

<pallas_src>
import jax
import jax.numpy as jnp
from jax import lax
from jax.experimental import pallas as pl
from jax.experimental.pallas import tpu as pltpu

DIMX = 13   # input features (num_flat_features)
DIMY = 4    # output features (fc2 out)
H = 4       # hidden (fc1 out)

M_PAD = 8    # output-feature rows padded 4 -> 8 (sublane aligned)
K_PAD = 16   # parameter-block columns: 13 weight cols + 1 bias col + 2 zero
TB_MAX = 8192  # max batch-lanes per grid step (keeps >=2 steps for large n)


def _affine_kernel(x_ref, wb_ref, o_ref):
    # x:  (tb, DIMX)      natural row-major batch tile
    # wb: (M_PAD, K_PAD)  VMEM-resident params: cols [0:13]=folded weight,
    #                     col 13 = folded bias, cols 14..15 = 0
    # o:  (M_PAD, tb)     lane-dense transposed output tile
    wb = wb_ref[...]
    w = wb[:, :DIMX]              # (M_PAD, DIMX)
    b = wb[:, DIMX:DIMX + 1]      # (M_PAD, 1)
    # Contract x's feature axis directly (w @ x.T on the MXU) -> (M_PAD, tb),
    # batch on lanes, no in-kernel data-movement transpose of x needed.
    o_ref[...] = (
        lax.dot_general(
            w,
            x_ref[...],
            dimension_numbers=(((1,), (1,)), ((), ())),
            preferred_element_type=jnp.float32,
        )
        + b
    )


def net_forward(x, w1, b1, w2, b2, *, tb=None):
    """Forward pass of `Net`: x.view(-1, num_flat_features) -> fc1 -> fc2."""
    n = x.shape[0]
    x2d = x.reshape(n, -1).astype(jnp.float32)   # x.view(-1, num_flat_features)

    # Fold fc2(fc1(x)) into one affine map (exact: no nonlinearity between):
    #   out = x @ (w2 @ w1).T + (w2 @ b1 + b2)
    w1f = w1.astype(jnp.float32)
    w2f = w2.astype(jnp.float32)
    wc = w2f @ w1f                                                 # (DIMY, DIMX)
    bc = w2f @ b1.astype(jnp.float32) + b2.astype(jnp.float32)     # (DIMY,)

    # Pack folded weight + bias into one tiny resident parameter block.
    wb = (
        jnp.zeros((M_PAD, K_PAD), jnp.float32)
        .at[:DIMY, :DIMX].set(wc)
        .at[:DIMY, DIMX].set(bc)
    )

    # Adaptive tile size: single full-array step for small/medium n (no
    # padding, block == array), big lane-dense tiles (>=2 steps) otherwise.
    if tb is None:
        tb = n if n <= TB_MAX else TB_MAX
    n_blocks = pl.cdiv(n, tb)

    outT = pl.pallas_call(
        _affine_kernel,
        out_shape=jax.ShapeDtypeStruct((M_PAD, n), jnp.float32),
        grid=(n_blocks,),
        in_specs=[
            pl.BlockSpec((tb, DIMX), lambda i: (i, 0)),      # x tile, natural layout
            pl.BlockSpec((M_PAD, K_PAD), lambda i: (0, 0)),  # params, VMEM-resident
        ],
        out_specs=pl.BlockSpec((M_PAD, tb), lambda i: (0, i)),
        compiler_params=pltpu.CompilerParams(
            dimension_semantics=("parallel",),
        ),
    )(x2d, wb)

    # Tiny slice + transpose back to the PyTorch (N, DIMY) layout.  Callers
    # that can consume the transposed (DIMY, N) result should take outT
    # directly to skip this launch entirely.
    return outT[:DIMY, :].T


def _reference(x, w1, b1, w2, b2):
    x2d = x.reshape(x.shape[0], -1)
    h1 = x2d @ w1.T + b1
    return h1 @ w2.T + b2


if __name__ == "__main__":
    key = jax.random.PRNGKey(0)
    k_x, k_w1, k_b1, k_w2, k_b2 = jax.random.split(key, 5)

    N = 600  # same batch size as the original script; still tiny
    x = jax.random.normal(k_x, (N, DIMX), dtype=jnp.float32)

    # PyTorch-style uniform(-1/sqrt(fan_in), +1/sqrt(fan_in)) init
    bound1 = 1.0 / jnp.sqrt(jnp.float32(DIMX))
    w1 = jax.random.uniform(k_w1, (H, DIMX), minval=-bound1, maxval=bound1, dtype=jnp.float32)
    b1 = jax.random.uniform(k_b1, (H,), minval=-bound1, maxval=bound1, dtype=jnp.float32)
    bound2 = 1.0 / jnp.sqrt(jnp.float32(H))
    w2 = jax.random.uniform(k_w2, (DIMY, H), minval=-bound2, maxval=bound2, dtype=jnp.float32)
    b2 = jax.random.uniform(k_b2, (DIMY,), minval=-bound2, maxval=bound2, dtype=jnp.float32)

    ref = _reference(x, w1, b1, w2, b2)

    # Default path: grid=(1,), tb=N, block == full array (no boundary padding).
    out = net_forward(x, w1, b1, w2, b2)
    jax.block_until_ready(out)
    assert out.shape == (N, DIMY)
    assert jnp.allclose(out, ref, atol=1e-5, rtol=1e-5), "mismatch vs reference (single-step)"

    # Multi-step path with a partial last tile (600 % 256 != 0): exercises the
    # grid>1 / boundary-masking invariant used for large batches.
    out2 = net_forward(x, w1, b1, w2, b2, tb=256)
    jax.block_until_ready(out2)
    assert jnp.allclose(out2, ref, atol=1e-5, rtol=1e-5), "mismatch vs reference (multi-step)"

    print("KERNEL_OK")
</pallas_src>

<mosaic_0001>
module attributes {stable_mosaic.version = 11 : i64} {
  func.func @_affine_kernel(%arg0: i32, %arg1: memref<600x13xf32, #tpu.memory_space<vmem>>, %arg2: memref<8x16xf32, #tpu.memory_space<vmem>>, %arg3: memref<8x600xf32, #tpu.memory_space<vmem>>) attributes {dimension_semantics = [#tpu.dimension_semantics<parallel>], iteration_bounds = array<i64: 1>, scalar_prefetch = 0 : i64, scratch_operands = 0 : i64, tpu.core_type = #tpu.core_type<tc>, window_params = [{transform_indices = @transform_0, window_bounds = array<i64: 600, 13>}, {pipeline_mode = #tpu.pipeline_mode<synchronous>, transform_indices = @transform_1, window_bounds = array<i64: 8, 16>}, {transform_indices = @transform_2, window_bounds = array<i64: 8, 600>}]} {
    %c0 = arith.constant 0 : index
    %c0_0 = arith.constant 0 : index
    %0 = vector.load %arg2[%c0, %c0_0] : memref<8x16xf32, #tpu.memory_space<vmem>>, vector<8x16xf32>
    %1 = vector.extract_strided_slice %0 {offsets = [0, 0], sizes = [8, 13], strides = [1, 1]} : vector<8x16xf32> to vector<8x13xf32>
    %2 = vector.extract_strided_slice %0 {offsets = [0, 13], sizes = [8, 1], strides = [1, 1]} : vector<8x16xf32> to vector<8x1xf32>
    %c0_1 = arith.constant 0 : index
    %c0_2 = arith.constant 0 : index
    %3 = vector.load %arg1[%c0_1, %c0_2] : memref<600x13xf32, #tpu.memory_space<vmem>>, vector<600x13xf32>
    %cst = arith.constant dense<0.000000e+00> : vector<8x600xf32>
    %4 = tpu.matmul %1, %3, %cst {dimension_numbers = #tpu.dot_dimension_numbers<[1], [1], [0], [0], [0, 0, 1, 0], [], []>} : vector<8x13xf32>, vector<600x13xf32>, vector<8x600xf32> -> vector<8x600xf32>
    %5 = vector.broadcast %2 : vector<8x1xf32> to vector<8x600xf32>
    %6 = arith.addf %4, %5 : vector<8x600xf32>
    %c0_3 = arith.constant 0 : index
    %c0_4 = arith.constant 0 : index
    %7 = vector.load %arg3[%c0_3, %c0_4] : memref<8x600xf32, #tpu.memory_space<vmem>>, vector<8x600xf32>
    tpu.vector_store %arg3[%c0_3, %c0_4], %6 {strides = array<i32>} : memref<8x600xf32, #tpu.memory_space<vmem>>, vector<8x600xf32>,
    return
  }
  func.func @transform_0(%arg0: i32) -> (i32, i32) {
    %c0_i32 = arith.constant 0 : i32
    %c0_i32_0 = arith.constant 0 : i32
    return %arg0, %c0_i32 : i32, i32
  }
  func.func @transform_1(%arg0: i32) -> (i32, i32) {
    %c0_i32 = arith.constant 0 : i32
    %c0_i32_0 = arith.constant 0 : i32
    %c0_i32_1 = arith.constant 0 : i32
    return %c0_i32, %c0_i32_0 : i32, i32
  }
  func.func @transform_2(%arg0: i32) -> (i32, i32) {
    %c0_i32 = arith.constant 0 : i32
    %c0_i32_0 = arith.constant 0 : i32
    return %c0_i32, %arg0 : i32, i32
  }
}

</mosaic_0001>

<llo_original>
// kernel: tpu_custom_call.1
$region0: #{tpu_custom_call.1}
  #allocation0 [shape = 'u32[]', space=smem, size = 0x4, offset = 0x4, fixed_abs, tag = 'smem constant byte address 0x4 - core index']
  #allocation1 [shape = 'u32[72,128]{1,0:T(1,128)}', space=vmem, size = 0x9000, scoped, tag = 'internal scratch']
  %s0 = inlined_call_operand.vmem [shape: f32[600,13], index: 0, kind: input, shape index: {}]
  %s1 = inlined_call_operand.vmem [shape: f32[8,16], index: 1, kind: input, shape index: {}]
  %s2 = inlined_call_operand.hbm [shape: f32[8,600], index: 2, kind: output, shape index: {}]
  %s3 = sld [smem:[#allocation0]]
  $region18: #{tpu_custom_call.1} parent=0
    _
  %s5 = ssub.s32 1, %s3
  %s6 = scalar_select 0, %s5, %s3
  $region1: #{tpu_custom_call.1} parent=0
    #allocation2 [shape = 'u8[20480]{0}', space=vmem, size = 0x5000, scoped, tag = 'output window, operand 0, single buffered']
    #allocation3 [shape = 's32[1]{0}', space=sflag, size = 0x4, scoped, tag = 'scoped memory for tpu_custom_call.1']
    %7 = vsyncpa [#allocation3], 0
    // Predicated region
    $region2: #{tpu_custom_call.1} parent=1 // pred_check
      _
    $region3: #{tpu_custom_call.1} parent=1 // pred_check_branch
      %9 = sbr.rel (0) target = $region5
    $region4: #{tpu_custom_call.1} parent=1 // pred_region
      _
    $region5: #{tpu_custom_call.1} parent=1 // pred_fallthru
      _
    // Predicated region
    $region6: #{tpu_custom_call.1} parent=1 // pred_check
      _
    $region7: #{tpu_custom_call.1} parent=1 // pred_check_branch
      %11 = sbr.rel (0) target = $region9
    $region8: #{tpu_custom_call.1} parent=1 // pred_region
      _
    $region9: #{tpu_custom_call.1} parent=1 // pred_fallthru
      _
    %v12 = vld [vmem:[%s1] sm:$0xff]
    %v13 = vld [vmem:[%s0] sm:$0xff]
    %v14 = vld [vmem:[%s0 + $0x8] sm:$0xff]
    %v15 = vld [vmem:[%s0 + $0x10] sm:$0xff]
    %v16 = vld [vmem:[%s0 + $0x18] sm:$0xff]
    %v17 = vld [vmem:[%s0 + $0x20] sm:$0xff]
    %v18 = vld [vmem:[%s0 + $0x28] sm:$0xff]
    %v19 = vld [vmem:[%s0 + $0x30] sm:$0xff]
    %v20 = vld [vmem:[%s0 + $0x38] sm:$0xff]
    %v21 = vld [vmem:[%s0 + $0x40] sm:$0xff]
    %v22 = vld [vmem:[%s0 + $0x48] sm:$0xff]
    %v23 = vld [vmem:[%s0 + $0x50] sm:$0xff]
    %v24 = vld [vmem:[%s0 + $0x58] sm:$0xff]
    %v25 = vld [vmem:[%s0 + $0x60] sm:$0xff]
    %v26 = vld [vmem:[%s0 + $0x68] sm:$0xff]
    %v27 = vld [vmem:[%s0 + $0x70] sm:$0xff]
    %v28 = vld [vmem:[%s0 + $0x78] sm:$0xff]
    %v29 = vld [vmem:[%s0 + $0x80] sm:$0xff]
    %v30 = vld [vmem:[%s0 + $0x88] sm:$0xff]
    %v31 = vld [vmem:[%s0 + $0x90] sm:$0xff]
    %v32 = vld [vmem:[%s0 + $0x98] sm:$0xff]
    %v33 = vld [vmem:[%s0 + $0xa0] sm:$0xff]
    %v34 = vld [vmem:[%s0 + $0xa8] sm:$0xff]
    %v35 = vld [vmem:[%s0 + $0xb0] sm:$0xff]
    %v36 = vld [vmem:[%s0 + $0xb8] sm:$0xff]
    %v37 = vld [vmem:[%s0 + $0xc0] sm:$0xff]
    %v38 = vld [vmem:[%s0 + $0xc8] sm:$0xff]
    %v39 = vld [vmem:[%s0 + $0xd0] sm:$0xff]
    %v40 = vld [vmem:[%s0 + $0xd8] sm:$0xff]
    %v41 = vld [vmem:[%s0 + $0xe0] sm:$0xff]
    %v42 = vld [vmem:[%s0 + $0xe8] sm:$0xff]
    %v43 = vld [vmem:[%s0 + $0xf0] sm:$0xff]
    %v44 = vld [vmem:[%s0 + $0xf8] sm:$0xff]
    %v45 = vld [vmem:[%s0 + $0x100] sm:$0xff]
    %v46 = vld [vmem:[%s0 + $0x108] sm:$0xff]
    %v47 = vld [vmem:[%s0 + $0x110] sm:$0xff]
    %v48 = vld [vmem:[%s0 + $0x118] sm:$0xff]
    %v49 = vld [vmem:[%s0 + $0x120] sm:$0xff]
    %v50 = vld [vmem:[%s0 + $0x128] sm:$0xff]
    %v51 = vld [vmem:[%s0 + $0x130] sm:$0xff]
    %v52 = vld [vmem:[%s0 + $0x138] sm:$0xff]
    %v53 = vld [vmem:[%s0 + $0x140] sm:$0xff]
    %v54 = vld [vmem:[%s0 + $0x148] sm:$0xff]
    %v55 = vld [vmem:[%s0 + $0x150] sm:$0xff]
    %v56 = vld [vmem:[%s0 + $0x158] sm:$0xff]
    %v57 = vld [vmem:[%s0 + $0x160] sm:$0xff]
    %v58 = vld [vmem:[%s0 + $0x168] sm:$0xff]
    %v59 = vld [vmem:[%s0 + $0x170] sm:$0xff]
    %v60 = vld [vmem:[%s0 + $0x178] sm:$0xff]
    %v61 = vld [vmem:[%s0 + $0x180] sm:$0xff]
    %v62 = vld [vmem:[%s0 + $0x188] sm:$0xff]
    %v63 = vld [vmem:[%s0 + $0x190] sm:$0xff]
    %v64 = vld [vmem:[%s0 + $0x198] sm:$0xff]
    %v65 = vld [vmem:[%s0 + $0x1a0] sm:$0xff]
    %v66 = vld [vmem:[%s0 + $0x1a8] sm:$0xff]
    %v67 = vld [vmem:[%s0 + $0x1b0] sm:$0xff]
    %v68 = vld [vmem:[%s0 + $0x1b8] sm:$0xff]
    %v69 = vld [vmem:[%s0 + $0x1c0] sm:$0xff]
    %v70 = vld [vmem:[%s0 + $0x1c8] sm:$0xff]
    %v71 = vld [vmem:[%s0 + $0x1d0] sm:$0xff]
    %v72 = vld [vmem:[%s0 + $0x1d8] sm:$0xff]
    %v73 = vld [vmem:[%s0 + $0x1e0] sm:$0xff]
    %v74 = vld [vmem:[%s0 + $0x1e8] sm:$0xff]
    %v75 = vld [vmem:[%s0 + $0x1f0] sm:$0xff]
    %v76 = vld [vmem:[%s0 + $0x1f8] sm:$0xff]
    %v77 = vld [vmem:[%s0 + $0x200] sm:$0xff]
    %v78 = vld [vmem:[%s0 + $0x208] sm:$0xff]
    %v79 = vld [vmem:[%s0 + $0x210] sm:$0xff]
    %v80 = vld [vmem:[%s0 + $0x218] sm:$0xff]
    %v81 = vld [vmem:[%s0 + $0x220] sm:$0xff]
    %v82 = vld [vmem:[%s0 + $0x228] sm:$0xff]
    %v83 = vld [vmem:[%s0 + $0x230] sm:$0xff]
    %v84 = vld [vmem:[%s0 + $0x238] sm:$0xff]
    %v85 = vld [vmem:[%s0 + $0x240] sm:$0xff]
    %v86 = vld [vmem:[%s0 + $0x248] sm:$0xff]
    %v87 = vld [vmem:[%s0 + $0x250] sm:$0xff]
    %89 = vset.pattern.permute.xlu0 13
    %90 = vperm.xlu0 %89, %v12
    %v91 = vpop.permute.xlu0 %90
    %vm93 = vcmask 105472
    %v94 = vsel %vm93, %v12, 0
    %v97 = vsel %vm93, %v13, 0
    %v100 = vsel %vm93, %v14, 0
    %v103 = vsel %vm93, %v15, 0
    %v106 = vsel %vm93, %v16, 0
    %v109 = vsel %vm93, %v17, 0
    %v112 = vsel %vm93, %v18, 0
    %v115 = vsel %vm93, %v19, 0
    %v118 = vsel %vm93, %v20, 0
    %v121 = vsel %vm93, %v21, 0
    %v124 = vsel %vm93, %v22, 0
    %v127 = vsel %vm93, %v23, 0
    %v130 = vsel %vm93, %v24, 0
    %v133 = vsel %vm93, %v25, 0
    %v136 = vsel %vm93, %v26, 0
    %v139 = vsel %vm93, %v27, 0
    %v142 = vsel %vm93, %v28, 0
    %v145 = vsel %vm93, %v29, 0
    %v148 = vsel %vm93, %v30, 0
    %v151 = vsel %vm93, %v31, 0
    %v154 = vsel %vm93, %v32, 0
    %v157 = vsel %vm93, %v33, 0
    %v160 = vsel %vm93, %v34, 0
    %v163 = vsel %vm93, %v35, 0
    %v166 = vsel %vm93, %v36, 0
    %v169 = vsel %vm93, %v37, 0
    %v172 = vsel %vm93, %v38, 0
    %v175 = vsel %vm93, %v39, 0
    %v178 = vsel %vm93, %v40, 0
    %v181 = vsel %vm93, %v41, 0
    %v184 = vsel %vm93, %v42, 0
    %v187 = vsel %vm93, %v43, 0
    %v190 = vsel %vm93, %v44, 0
    %v193 = vsel %vm93, %v45, 0
    %v196 = vsel %vm93, %v46, 0
    %v199 = vsel %vm93, %v47, 0
    %v202 = vsel %vm93, %v48, 0
    %v205 = vsel %vm93, %v49, 0
    %v208 = vsel %vm93, %v50, 0
    %v211 = vsel %vm93, %v51, 0
    %v214 = vsel %vm93, %v52, 0
    %v217 = vsel %vm93, %v53, 0
    %v220 = vsel %vm93, %v54, 0
    %v223 = vsel %vm93, %v55, 0
    %v226 = vsel %vm93, %v56, 0
    %v229 = vsel %vm93, %v57, 0
    %v232 = vsel %vm93, %v58, 0
    %v235 = vsel %vm93, %v59, 0
    %v238 = vsel %vm93, %v60, 0
    %v241 = vsel %vm93, %v61, 0
    %v244 = vsel %vm93, %v62, 0
    %v247 = vsel %vm93, %v63, 0
    %v250 = vsel %vm93, %v64, 0
    %v253 = vsel %vm93, %v65, 0
    %v256 = vsel %vm93, %v66, 0
    %v259 = vsel %vm93, %v67, 0
    %v262 = vsel %vm93, %v68, 0
    %v265 = vsel %vm93, %v69, 0
    %v268 = vsel %vm93, %v70, 0
    %v271 = vsel %vm93, %v71, 0
    %v274 = vsel %vm93, %v72, 0
    %v277 = vsel %vm93, %v73, 0
    %v280 = vsel %vm93, %v74, 0
    %v283 = vsel %vm93, %v75, 0
    %v286 = vsel %vm93, %v76, 0
    %v289 = vsel %vm93, %v77, 0
    %v292 = vsel %vm93, %v78, 0
    %v295 = vsel %vm93, %v79, 0
    %v298 = vsel %vm93, %v80, 0
    %v301 = vsel %vm93, %v81, 0
    %v304 = vsel %vm93, %v82, 0
    %v307 = vsel %vm93, %v83, 0
    %v310 = vsel %vm93, %v84, 0
    %v313 = vsel %vm93, %v85, 0
    %v316 = vsel %vm93, %v86, 0
    %v319 = vsel %vm93, %v87, 0
    %321 = vmatpush.xpose.msra.mxu0 %v142
    %322 = vmatpush.xpose.msra.mxu0 %v139
    %323 = vmatpush.xpose.msra.mxu0 %v136
    %324 = vmatpush.xpose.msra.mxu0 %v133
    %325 = vmatpush.xpose.msra.mxu0 %v130
    %326 = vmatpush.xpose.msra.mxu0 %v127
    %327 = vmatpush.xpose.msra.mxu0 %v124
    %328 = vmatpush.xpose.msra.mxu0 %v121
    %329 = vmatpush.xpose.msra.mxu0 %v118
    %330 = vmatpush.xpose.msra.mxu0 %v115
    %331 = vmatpush.xpose.msra.mxu0 %v112
    %332 = vmatpush.xpose.msra.mxu0 %v109
    %333 = vmatpush.xpose.msra.mxu0 %v106
    %334 = vmatpush.xpose.msra.mxu0 %v103
    %335 = vmatpush.xpose.msra.mxu0 %v100
    %336 = vmatpush.xpose.msra.mxu0 %v97
    %337 = vmatmul.f32.gmra.mxu0 %v94
    %v338 = vpop.f32.mrf.mxu0
    %v339 = vadd.f32 %v91, %v338
    %340 = vdwg.mxu0
    %341 = vmatpush.xpose.msra.mxu0 %v190
    %342 = vmatpush.xpose.msra.mxu0 %v187
    %343 = vmatpush.xpose.msra.mxu0 %v184
    %344 = vmatpush.xpose.msra.mxu0 %v181
    %345 = vmatpush.xpose.msra.mxu0 %v178
    %346 = vmatpush.xpose.msra.mxu0 %v175
    %347 = vmatpush.xpose.msra.mxu0 %v172
    %348 = vmatpush.xpose.msra.mxu0 %v169
    %349 = vmatpush.xpose.msra.mxu0 %v166
    %350 = vmatpush.xpose.msra.mxu0 %v163
    %351 = vmatpush.xpose.msra.mxu0 %v160
    %352 = vmatpush.xpose.msra.mxu0 %v157
    %353 = vmatpush.xpose.msra.mxu0 %v154
    %354 = vmatpush.xpose.msra.mxu0 %v151
    %355 = vmatpush.xpose.msra.mxu0 %v148
    %356 = vmatpush.xpose.msra.mxu0 %v145
    %357 = vmatmul.f32.gmra.mxu0 %v94
    %v358 = vpop.f32.mrf.mxu0
    %v359 = vadd.f32 %v91, %v358
    %360 = vdwg.mxu0
    %361 = vmatpush.xpose.msra.mxu0 %v238
    %362 = vmatpush.xpose.msra.mxu0 %v235
    %363 = vmatpush.xpose.msra.mxu0 %v232
    %364 = vmatpush.xpose.msra.mxu0 %v229
    %365 = vmatpush.xpose.msra.mxu0 %v226
    %366 = vmatpush.xpose.msra.mxu0 %v223
    %367 = vmatpush.xpose.msra.mxu0 %v220
    %368 = vmatpush.xpose.msra.mxu0 %v217
    %369 = vmatpush.xpose.msra.mxu0 %v214
    %370 = vmatpush.xpose.msra.mxu0 %v211
    %371 = vmatpush.xpose.msra.mxu0 %v208
    %372 = vmatpush.xpose.msra.mxu0 %v205
    %373 = vmatpush.xpose.msra.mxu0 %v202
    %374 = vmatpush.xpose.msra.mxu0 %v199
    %375 = vmatpush.xpose.msra.mxu0 %v196
    %376 = vmatpush.xpose.msra.mxu0 %v193
    %377 = vmatmul.f32.gmra.mxu0 %v94
    %v378 = vpop.f32.mrf.mxu0
    %v379 = vadd.f32 %v91, %v378
    %380 = vdwg.mxu0
    %381 = vmatpush.xpose.msra.mxu0 %v286
    %382 = vmatpush.xpose.msra.mxu0 %v283
    %383 = vmatpush.xpose.msra.mxu0 %v280
    %384 = vmatpush.xpose.msra.mxu0 %v277
    %385 = vmatpush.xpose.msra.mxu0 %v274
    %386 = vmatpush.xpose.msra.mxu0 %v271
    %387 = vmatpush.xpose.msra.mxu0 %v268
    %388 = vmatpush.xpose.msra.mxu0 %v265
    %389 = vmatpush.xpose.msra.mxu0 %v262
    %390 = vmatpush.xpose.msra.mxu0 %v259
    %391 = vmatpush.xpose.msra.mxu0 %v256
    %392 = vmatpush.xpose.msra.mxu0 %v253
    %393 = vmatpush.xpose.msra.mxu0 %v250
    %394 = vmatpush.xpose.msra.mxu0 %v247
    %395 = vmatpush.xpose.msra.mxu0 %v244
    %396 = vmatpush.xpose.msra.mxu0 %v241
    %397 = vmatmul.f32.gmra.mxu0 %v94
    %v398 = vpop.f32.mrf.mxu0
    %v399 = vadd.f32 %v91, %v398
    %400 = vdwg.mxu0
    %401 = vmatpush.xpose.msra.mxu0 0.0
    %402 = vmatpush.xpose.msra.mxu0 0.0
    %403 = vmatpush.xpose.msra.mxu0 0.0
    %404 = vmatpush.xpose.msra.mxu0 0.0
    %405 = vmatpush.xpose.msra.mxu0 0.0
    %406 = vmatpush.xpose.msra.mxu0 %v319
    %407 = vmatpush.xpose.msra.mxu0 %v316
    %408 = vmatpush.xpose.msra.mxu0 %v313
    %409 = vmatpush.xpose.msra.mxu0 %v310
    %410 = vmatpush.xpose.msra.mxu0 %v307
    %411 = vmatpush.xpose.msra.mxu0 %v304
    %412 = vmatpush.xpose.msra.mxu0 %v301
    %413 = vmatpush.xpose.msra.mxu0 %v298
    %414 = vmatpush.xpose.msra.mxu0 %v295
    %415 = vmatpush.xpose.msra.mxu0 %v292
    %416 = vmatpush.xpose.msra.mxu0 %v289
    %417 = vmatmul.f32.gmra.mxu0 %v94
    %v418 = vpop.f32.mrf.mxu0
    %v419 = vadd.f32 %v91, %v418
    %420 = vdwg.mxu0
    %421 = vst [vmem:[#allocation2] sm:$0xff] %v339
    %422 = vst [vmem:[#allocation2 + $0x8] sm:$0xff] %v359
    %423 = vst [vmem:[#allocation2 + $0x10] sm:$0xff] %v379
    %424 = vst [vmem:[#allocation2 + $0x18] sm:$0xff] %v399
    %vm425 = vcmask 719872
    %426 = vst.msk [vmem:[#allocation2 + $0x20] sm:$0xff] %vm425, %v419
    // Predicated region
    $region10: #{tpu_custom_call.1} parent=1 // pred_check
      _
    $region11: #{tpu_custom_call.1} parent=1 // pred_check_branch
      %428 = sbr.rel (0) target = $region13
    $region12: #{tpu_custom_call.1} parent=1 // pred_region
      %430 = vsyncadd [#allocation3], 0
      %s432 = sshll.u32 [#allocation2], 4
      %s433 = int_to_ptr.vmem [resolvable:$true] %s432
      %s434 = sshll.u32 %s2, 4
      %s435 = int_to_ptr.hbm [resolvable:$true] %s434
      %437 = dma.vmem_to_hbm [thread:$0]  %s433, 640, %s435, [#allocation3]
    $region13: #{tpu_custom_call.1} parent=1 // pred_fallthru
      _
    // Predicated region
    $region14: #{tpu_custom_call.1} parent=1 // pred_check
      _
    $region15: #{tpu_custom_call.1} parent=1 // pred_check_branch
      %439 = sbr.rel (0) target = $region17
    $region16: #{tpu_custom_call.1} parent=1 // pred_region
      %441 = dma.done [#allocation3], 640
    $region17: #{tpu_custom_call.1} parent=1 // pred_fallthru
      _
    %442 = vsyncpa [#allocation3], 1

</llo_original>
